<compile_context>
chip_gen: v7x
topology: tpu7x:2x2x1
jax: 0.10.0
libtpu: 0.0.40
codegen_flags: <defaults>
</compile_context>

<pallas_src>
import jax
import jax.numpy as jnp
from jax.experimental import pallas as pl
from jax.experimental.pallas import tpu as pltpu


def _round_up(x, m):
    return ((x + m - 1) // m) * m


def prepare_linear_params(weight, bias):
    """One-time (init-time) padding of the frozen nn.Linear parameters.

    weight: [out_features, in_features] (PyTorch layout), bias: [out_features].
    Returns (w_pad [N_pad, K], b_pad [N_pad, 1], out_features).
    """
    out_features, in_features = weight.shape
    n_pad = _round_up(out_features, 8)  # sublane padding only
    w_pad = jnp.zeros((n_pad, in_features), weight.dtype).at[:out_features, :].set(weight)
    b_pad = jnp.zeros((n_pad, 1), bias.dtype).at[:out_features, 0].set(bias)
    return w_pad, b_pad, out_features


def _linear_kernel(w_ref, b_ref, x_ref, o_ref):
    # w_ref: [N_pad, K] (resident)   b_ref: [N_pad, 1] (resident)
    # x_ref: [K, TB]  (batch on lanes)   o_ref: [N_pad, TB]  (lane-dense store)
    y = jnp.dot(w_ref[...], x_ref[...], preferred_element_type=jnp.float32)
    o_ref[...] = (y + b_ref[...]).astype(o_ref.dtype)


def linear_pallas(x, w_pad, b_pad, out_features, *, batch_tile=8192,
                  force_pallas=False):
    """y = x @ W^T + b, with arbitrary leading dims on x (nn.Linear semantics)."""
    n_pad, in_features = w_pad.shape
    assert x.shape[-1] == in_features, "x last dim must match in_features"

    lead_shape = x.shape[:-1]
    x2 = x.reshape(-1, in_features)
    B = x2.shape[0]

    # ---- Small-shape fast path: the pallas_call launch would dominate. ----
    if not force_pallas and B * out_features < 16384:
        y = x2 @ w_pad[:out_features, :].T + b_pad[:out_features, 0]
        return y.reshape(lead_shape + (out_features,)).astype(x.dtype)

    # ---- Pallas path: batch on the lane axis. ----
    batch_tile = max(128, _round_up(batch_tile, 128))
    B128 = _round_up(B, 128)
    # >=2 tiles whenever there is more than one 128-lane group of batch, so the
    # 'parallel' grid axis can shard across v7x's two TensorCores; balance tile
    # sizes so batch padding stays <= 128 * n_tiles.
    n_tiles = max(pl.cdiv(B128, batch_tile), 2 if B128 > 128 else 1)
    tb = _round_up(pl.cdiv(B128, n_tiles), 128)
    grid_n = pl.cdiv(B128, tb)
    bp = grid_n * tb

    x_t = x2.T  # [K, B]; one XLA copy, repaid by the un-padded output writes
    if bp != B:
        x_t = jnp.pad(x_t, ((0, 0), (0, bp - B)))

    out_t = pl.pallas_call(
        _linear_kernel,
        out_shape=jax.ShapeDtypeStruct((n_pad, bp), x.dtype),
        grid_spec=pltpu.PrefetchScalarGridSpec(
            num_scalar_prefetch=0,
            grid=(grid_n,),
            in_specs=[
                # Grid-invariant weight & bias stay resident in VMEM.
                pl.BlockSpec((n_pad, in_features), lambda i: (0, 0)),
                pl.BlockSpec((n_pad, 1), lambda i: (0, 0)),
                # x^T tile: K sublanes x TB lanes.
                pl.BlockSpec((in_features, tb), lambda i: (0, i)),
            ],
            out_specs=pl.BlockSpec((n_pad, tb), lambda i: (0, i)),
        ),
        compiler_params=pltpu.CompilerParams(
            dimension_semantics=("parallel",),
        ),
    )(w_pad, b_pad, x_t)

    # Strip sublane (N) padding and batch padding, restore [..., out_features].
    y = out_t[:out_features, :B].T
    return y.reshape(lead_shape + (out_features,))


if __name__ == "__main__":
    key = jax.random.PRNGKey(0)
    kx, kw, kb = jax.random.split(key, 3)

    in_features, out_features = 10, 2
    batch = 8

    # Deterministic init mimicking nn.Linear's uniform(-1/sqrt(in), 1/sqrt(in)).
    bound = 1.0 / (in_features ** 0.5)
    weight = jax.random.uniform(kw, (out_features, in_features), jnp.float32,
                                minval=-bound, maxval=bound)
    bias = jax.random.uniform(kb, (out_features,), jnp.float32,
                              minval=-bound, maxval=bound)
    x = jax.random.normal(kx, (batch, in_features), jnp.float32)

    # Hoisted (init-time) parameter padding.
    w_pad, b_pad, n_out = prepare_linear_params(weight, bias)

    # Pallas kernel path (forced, since 8x10x2 would otherwise take the
    # small-shape XLA fast path).
    fwd_kernel = jax.jit(
        lambda xx: linear_pallas(xx, w_pad, b_pad, n_out, force_pallas=True))
    out = jax.block_until_ready(fwd_kernel(x))

    ref = x @ weight.T + bias
    assert out.shape == (batch, out_features)
    assert jnp.allclose(out, ref, atol=1e-5, rtol=1e-5)

    # Fast path + arbitrary leading dims (nn.Linear parity).
    x3 = x.reshape(2, 4, in_features)
    out3 = jax.block_until_ready(linear_pallas(x3, w_pad, b_pad, n_out))
    assert out3.shape == (2, 4, out_features)
    assert jnp.allclose(out3.reshape(batch, out_features), ref, atol=1e-5, rtol=1e-5)

    print("KERNEL_OK")
</pallas_src>

<mosaic_0001>
module attributes {stable_mosaic.version = 11 : i64} {
  func.func @_linear_kernel(%arg0: i32, %arg1: memref<8x10xf32, #tpu.memory_space<vmem>>, %arg2: memref<8x1xf32, #tpu.memory_space<vmem>>, %arg3: memref<10x128xf32, #tpu.memory_space<vmem>>, %arg4: memref<8x128xf32, #tpu.memory_space<vmem>>) attributes {dimension_semantics = [#tpu.dimension_semantics<parallel>], iteration_bounds = array<i64: 1>, scalar_prefetch = 0 : i64, scratch_operands = 0 : i64, tpu.core_type = #tpu.core_type<tc>, window_params = [{pipeline_mode = #tpu.pipeline_mode<synchronous>, transform_indices = @transform_0, window_bounds = array<i64: 8, 10>}, {pipeline_mode = #tpu.pipeline_mode<synchronous>, transform_indices = @transform_1, window_bounds = array<i64: 8, 1>}, {transform_indices = @transform_2, window_bounds = array<i64: 10, 128>}, {transform_indices = @transform_3, window_bounds = array<i64: 8, 128>}]} {
    %c0 = arith.constant 0 : index
    %c0_0 = arith.constant 0 : index
    %0 = vector.load %arg1[%c0, %c0_0] : memref<8x10xf32, #tpu.memory_space<vmem>>, vector<8x10xf32>
    %c0_1 = arith.constant 0 : index
    %c0_2 = arith.constant 0 : index
    %1 = vector.load %arg3[%c0_1, %c0_2] : memref<10x128xf32, #tpu.memory_space<vmem>>, vector<10x128xf32>
    %cst = arith.constant dense<0.000000e+00> : vector<8x128xf32>
    %2 = tpu.matmul %0, %1, %cst {dimension_numbers = #tpu.dot_dimension_numbers<[1], [0], [0], [1], [0, 0, 1, 1], [], []>} : vector<8x10xf32>, vector<10x128xf32>, vector<8x128xf32> -> vector<8x128xf32>
    %c0_3 = arith.constant 0 : index
    %c0_4 = arith.constant 0 : index
    %3 = vector.load %arg2[%c0_3, %c0_4] : memref<8x1xf32, #tpu.memory_space<vmem>>, vector<8x1xf32>
    %4 = vector.broadcast %3 : vector<8x1xf32> to vector<8x128xf32>
    %5 = arith.addf %2, %4 : vector<8x128xf32>
    %c0_5 = arith.constant 0 : index
    %c0_6 = arith.constant 0 : index
    %6 = vector.load %arg4[%c0_5, %c0_6] : memref<8x128xf32, #tpu.memory_space<vmem>>, vector<8x128xf32>
    tpu.vector_store %arg4[%c0_5, %c0_6], %5 {strides = array<i32>} : memref<8x128xf32, #tpu.memory_space<vmem>>, vector<8x128xf32>,
    return
  }
  func.func @transform_0(%arg0: i32) -> (i32, i32) {
    %c0_i32 = arith.constant 0 : i32
    %c0_i32_0 = arith.constant 0 : i32
    %c0_i32_1 = arith.constant 0 : i32
    return %c0_i32, %c0_i32_0 : i32, i32
  }
  func.func @transform_1(%arg0: i32) -> (i32, i32) {
    %c0_i32 = arith.constant 0 : i32
    %c0_i32_0 = arith.constant 0 : i32
    %c0_i32_1 = arith.constant 0 : i32
    return %c0_i32, %c0_i32_0 : i32, i32
  }
  func.func @transform_2(%arg0: i32) -> (i32, i32) {
    %c0_i32 = arith.constant 0 : i32
    %c0_i32_0 = arith.constant 0 : i32
    return %c0_i32, %arg0 : i32, i32
  }
  func.func @transform_3(%arg0: i32) -> (i32, i32) {
    %c0_i32 = arith.constant 0 : i32
    %c0_i32_0 = arith.constant 0 : i32
    return %c0_i32, %arg0 : i32, i32
  }
}

</mosaic_0001>

<llo_original>
// kernel: _lambda_.1
$region0: #{_lambda_.1}
  #allocation0 [shape = 'u32[]', space=smem, size = 0x4, offset = 0x4, fixed_abs, tag = 'smem constant byte address 0x4 - core index']
  #allocation1 [shape = 'u32[144,128]{1,0:T(1,128)}', space=vmem, size = 0x12000, scoped, tag = 'internal scratch']
  %s0 = inlined_call_operand.vmem [shape: f32[8,10], index: 0, kind: input, shape index: {}]
  %s1 = inlined_call_operand.vmem [shape: f32[8,1], index: 1, kind: input, shape index: {}]
  %s2 = inlined_call_operand.vmem [shape: f32[10,128], index: 2, kind: input, shape index: {}]
  %s3 = inlined_call_operand.vmem [shape: f32[8,128], index: 3, kind: output, shape index: {}]
  %s4 = sld [smem:[#allocation0]]
  $region22: #{_lambda_.1} parent=0
    _
  %s6 = ssub.s32 1, %s4
  %s7 = scalar_select 0, %s6, %s4
  // Predicated region
  $region2: #{_lambda_.1} parent=0 // pred_check
    _
  $region3: #{_lambda_.1} parent=0 // pred_check_branch
    %9 = sbr.rel (0) target = $region5
  $region4: #{_lambda_.1} parent=0 // pred_region
    _
  $region5: #{_lambda_.1} parent=0 // pred_fallthru
    _
  // Predicated region
  $region6: #{_lambda_.1} parent=0 // pred_check
    _
  $region7: #{_lambda_.1} parent=0 // pred_check_branch
    %11 = sbr.rel (0) target = $region9
  $region8: #{_lambda_.1} parent=0 // pred_region
    _
  $region9: #{_lambda_.1} parent=0 // pred_fallthru
    _
  // Predicated region
  $region10: #{_lambda_.1} parent=0 // pred_check
    _
  $region11: #{_lambda_.1} parent=0 // pred_check_branch
    %13 = sbr.rel (0) target = $region13
  $region12: #{_lambda_.1} parent=0 // pred_region
    _
  $region13: #{_lambda_.1} parent=0 // pred_fallthru
    _
  %v14 = vld [vmem:[%s0] sm:$0xff]
  %v15 = vld [vmem:[%s2] sm:$0xff]
  %v16 = vld [vmem:[%s2 + $0x8] sm:$0x3]
  %v17 = vld [vmem:[%s1] sm:$0xff]
  %19 = vset.pattern.permute.xlu0 0
  %20 = vperm.xlu0 %19, %v17
  %v21 = vpop.permute.xlu0 %20
  %vm23 = vcmask 80896
  %v25 = vsel %vm23, %v14, 0
  %vm27 = vcmask 1041408
  %v29 = vsel %vm27, %v16, 0
  %31 = vmatprep.subr.mxu0 0.0
  %32 = vmatpush1.msra.mxu0 %v15
  %33 = vmatprep.subr.mxu0 0.0
  %34 = vmatpush1.msra.mxu0 %v29
  %35 = vmatprep.subr.mxu0 0.0
  %36 = vmatpush1.msra.mxu0 0.0
  %37 = vmatprep.subr.mxu0 0.0
  %38 = vmatpush1.msra.mxu0 0.0
  %39 = vmatprep.subr.mxu0 0.0
  %40 = vmatpush1.msra.mxu0 0.0
  %41 = vmatprep.subr.mxu0 0.0
  %42 = vmatpush1.msra.mxu0 0.0
  %43 = vmatprep.subr.mxu0 0.0
  %44 = vmatpush1.msra.mxu0 0.0
  %45 = vmatprep.subr.mxu0 0.0
  %46 = vmatpush1.msra.mxu0 0.0
  %47 = vmatprep.subr.mxu0 0.0
  %48 = vmatpush1.msra.mxu0 0.0
  %49 = vmatprep.subr.mxu0 0.0
  %50 = vmatpush1.msra.mxu0 0.0
  %51 = vmatprep.subr.mxu0 0.0
  %52 = vmatpush1.msra.mxu0 0.0
  %53 = vmatprep.subr.mxu0 0.0
  %54 = vmatpush1.msra.mxu0 0.0
  %55 = vmatprep.subr.mxu0 0.0
  %56 = vmatpush1.msra.mxu0 0.0
  %57 = vmatprep.subr.mxu0 0.0
  %58 = vmatpush1.msra.mxu0 0.0
  %59 = vmatprep.subr.mxu0 0.0
  %60 = vmatpush1.msra.mxu0 0.0
  %61 = vmatprep.subr.mxu0 0.0
  %62 = vmatpush1.msra.mxu0 0.0
  %63 = vmatprep.subr.mxu0 0.0
  %64 = vmatpush1.msra.mxu0 0.0
  %65 = vmatprep.subr.mxu0 0.0
  %66 = vmatpush1.msra.mxu0 0.0
  %67 = vmatprep.subr.mxu0 0.0
  %68 = vmatpush1.msra.mxu0 0.0
  %69 = vmatprep.subr.mxu0 0.0
  %70 = vmatpush1.msra.mxu0 0.0
  %71 = vmatprep.subr.mxu0 0.0
  %72 = vmatpush1.msra.mxu0 0.0
  %73 = vmatprep.subr.mxu0 0.0
  %74 = vmatpush1.msra.mxu0 0.0
  %75 = vmatprep.subr.mxu0 0.0
  %76 = vmatpush1.msra.mxu0 0.0
  %77 = vmatprep.subr.mxu0 0.0
  %78 = vmatpush1.msra.mxu0 0.0
  %79 = vmatprep.subr.mxu0 0.0
  %80 = vmatpush1.msra.mxu0 0.0
  %81 = vmatprep.subr.mxu0 0.0
  %82 = vmatpush1.msra.mxu0 0.0
  %83 = vmatprep.subr.mxu0 0.0
  %84 = vmatpush1.msra.mxu0 0.0
  %85 = vmatprep.subr.mxu0 0.0
  %86 = vmatpush1.msra.mxu0 0.0
  %87 = vmatprep.subr.mxu0 0.0
  %88 = vmatpush1.msra.mxu0 0.0
  %89 = vmatprep.subr.mxu0 0.0
  %90 = vmatpush1.msra.mxu0 0.0
  %91 = vmatprep.subr.mxu0 0.0
  %92 = vmatpush1.msra.mxu0 0.0
  %93 = vmatprep.subr.mxu0 0.0
  %94 = vmatpush1.msra.mxu0 0.0
  %95 = vmatprep.mubr.f32.mxu0 0.0
  %96 = vmatmul.mubr.f32.gmra.mrb[0].mxu0 %v25
  %v97 = vpop.f32.mrb[0].mxu0
  %v98 = vadd.f32 %v21, %v97
  %v99 = vpop.f32.mrb[0].mxu0
  %100 = vdwg.mxu0
  %101 = vst [vmem:[%s3] sm:$0xff] %v98
  // Predicated region
  $region14: #{_lambda_.1} parent=0 // pred_check
    _
  $region15: #{_lambda_.1} parent=0 // pred_check_branch
    %103 = sbr.rel (0) target = $region17
  $region16: #{_lambda_.1} parent=0 // pred_region
    _
  $region17: #{_lambda_.1} parent=0 // pred_fallthru
    _
  // Predicated region
  $region18: #{_lambda_.1} parent=0 // pred_check
    _
  $region19: #{_lambda_.1} parent=0 // pred_check_branch
    %105 = sbr.rel (0) target = $region21
  $region20: #{_lambda_.1} parent=0 // pred_region
    _
  $region21: #{_lambda_.1} parent=0 // pred_fallthru
    _

</llo_original>
